<compile_context>
chip_gen: v6e
topology: v6e:2x2x1
jax: 0.10.0
libtpu: 0.0.40
codegen_flags: <defaults>
</compile_context>

<pallas_src>
import jax
import jax.numpy as jnp
from jax import lax
from jax.experimental import pallas as pl
from jax.experimental.pallas import tpu as pltpu

_BN_EPS = 1e-5
_INV_SQRT2 = 0.7071067811865476


def _round_up(x, m):
    return ((x + m - 1) // m) * m


# ---------------------------------------------------------------------------
# Fused kernel: whole MLP (multi-pass, batch-tiled full-batch BatchNorm)
# ---------------------------------------------------------------------------
def make_fused_mlp_kernel(num_hidden, n_true, tile_n, n_pad):
    """Kernel for `num_hidden` (Linear->BN->GELU) layers + final Linear.

    Ref order:
      inputs : x, [W_l, gamma_l, beta_l] * num_hidden, W_last, b_last
      outputs: out
      scratch: scale_l * num_hidden, shift_l * num_hidden, acc_sum, acc_sq
    Grid: (num_hidden + 1, num_batch_tiles); pass axis outermost.
    """
    K = num_hidden
    need_mask = n_pad != n_true
    inv_n = 1.0 / float(n_true)

    def kernel(*refs):
        x_ref = refs[0]
        w_hidden = [refs[1 + 3 * l] for l in range(K)]
        gammas = [refs[2 + 3 * l] for l in range(K)]
        betas = [refs[3 + 3 * l] for l in range(K)]
        w_last = refs[3 * K + 1]
        b_last = refs[3 * K + 2]
        o_ref = refs[3 * K + 3]
        scale_refs = refs[3 * K + 4: 3 * K + 4 + K]
        shift_refs = refs[3 * K + 4 + K: 3 * K + 4 + 2 * K]
        acc_sum = refs[3 * K + 4 + 2 * K]
        acc_sq = refs[3 * K + 5 + 2 * K]

        p = pl.program_id(0)          # pass index: 0..K
        t = pl.program_id(1)          # batch-tile index
        nt = pl.num_programs(1)

        # One-time init: identity scale/shift so not-yet-finalized layers
        # produce finite (unused) values instead of NaN/Inf.
        @pl.when((p == 0) & (t == 0))
        def _():
            for l in range(K):
                scale_refs[l][...] = jnp.ones_like(scale_refs[l])
                shift_refs[l][...] = jnp.zeros_like(shift_refs[l])

        # Zero the stats accumulators at the start of every stats pass.
        @pl.when((t == 0) & (p < K))
        def _():
            acc_sum[...] = jnp.zeros_like(acc_sum)
            acc_sq[...] = jnp.zeros_like(acc_sq)

        if need_mask:
            rows = t * tile_n + lax.broadcasted_iota(jnp.int32, (tile_n, 1), 0)
            row_mask = (rows < n_true).astype(jnp.float32)

        h = x_ref[...]

        for l in range(K):
            # Linear (hidden bias omitted: cancelled by training-mode BN).
            y = jnp.dot(h, w_hidden[l][...], preferred_element_type=jnp.float32)

            # Full-batch BN statistics for layer l, accumulated in pass p == l.
            @pl.when(p == l)
            def _(y=y):
                acc_sum[...] += jnp.sum(y, axis=0, keepdims=True)
                acc_sq[...] += jnp.sum(y * y, axis=0, keepdims=True)

            # Finalize layer-l scale/shift at the last tile of its stats pass.
            # NOTE: single-pass E[y^2]-E[y]^2 in f32 (clamped) - adequate for
            # these magnitudes; switch to Welford combination if |mean|>>std.
            @pl.when((p == l) & (t == nt - 1))
            def _(l=l):
                mean = acc_sum[...] * inv_n
                var = jnp.maximum(acc_sq[...] * inv_n - mean * mean, 0.0)
                s = gammas[l][...] * lax.rsqrt(var + _BN_EPS)
                scale_refs[l][...] = s
                shift_refs[l][...] = betas[l][...] - mean * s

            # Folded BN (one FMA) + exact erf GELU (matches F.gelu default).
            z = y * scale_refs[l][...] + shift_refs[l][...]
            h = 0.5 * z * (1.0 + lax.erf(z * _INV_SQRT2))
            if need_mask:
                h = h * row_mask   # keep zero-padded batch rows exactly zero

        # Deterministic (cheap, tiny) writeback for non-final passes; the
        # final pass overwrites every output block last in grid order.
        @pl.when(p < K)
        def _():
            o_ref[...] = jnp.zeros_like(o_ref)

        @pl.when(p == K)
        def _(h=h):
            out = jnp.dot(h, w_last[...], preferred_element_type=jnp.float32)
            out = out + b_last[...]
            o_ref[...] = out.astype(o_ref.dtype)

    return kernel


# ---------------------------------------------------------------------------
# Wrapper: batch-tiled single pallas_call, natural (unpadded) feature widths
# ---------------------------------------------------------------------------
def mlp_forward(x, params, *, batch_tile=256):
    """params: dict with 'linears' [(W,b), ...] (W as (in,out)) and 'norms'
    [(gamma,beta), ...].  Returns (batch, output_dim) float32."""
    linears = params["linears"]
    norms = params["norms"]
    num_layers = len(linears)
    K = num_layers - 1
    assert K >= 1, "num_layers==1 (pure Linear) path not implemented here"

    n, d_in = x.shape
    hidden = linears[0][0].shape[1]
    d_out = linears[-1][0].shape[1]

    # Batch tiling: tile rows must be a multiple of 8 (sublane); pad the batch
    # (rows only) if needed - padded rows are masked out of the BN statistics.
    tn = min(int(batch_tile), _round_up(n, 8))
    tn = _round_up(tn, 8)
    n_pad = _round_up(n, tn)
    nt = n_pad // tn

    x_in = x.astype(jnp.float32)
    if n_pad != n:
        x_in = jnp.pad(x_in, ((0, n_pad - n), (0, 0)))

    args = [x_in]
    in_specs = [pl.BlockSpec((tn, d_in), lambda p, t: (t, 0))]

    param_bytes = 0
    for l in range(K):
        w, _b = linears[l]   # hidden bias dropped (cancelled by training BN)
        gamma, beta = norms[l]
        w = w.astype(jnp.float32)
        g = gamma.reshape(1, -1).astype(jnp.float32)
        bt = beta.reshape(1, -1).astype(jnp.float32)
        args += [w, g, bt]
        # Constant index maps -> parameters DMA'd once, VMEM-resident.
        in_specs += [
            pl.BlockSpec(w.shape, lambda p, t: (0, 0)),
            pl.BlockSpec(g.shape, lambda p, t: (0, 0)),
            pl.BlockSpec(bt.shape, lambda p, t: (0, 0)),
        ]
        param_bytes += (w.size + g.size + bt.size) * 4

    w_last, b_last = linears[-1]
    w_last = w_last.astype(jnp.float32)
    b_last = b_last.reshape(1, -1).astype(jnp.float32)
    args += [w_last, b_last]
    in_specs += [
        pl.BlockSpec(w_last.shape, lambda p, t: (0, 0)),
        pl.BlockSpec(b_last.shape, lambda p, t: (0, 0)),
    ]
    param_bytes += (w_last.size + b_last.size) * 4

    out_spec = pl.BlockSpec((tn, d_out), lambda p, t: (t, 0))

    scratch_shapes = (
        [pltpu.VMEM((1, hidden), jnp.float32) for _ in range(K)]   # scale_l
        + [pltpu.VMEM((1, hidden), jnp.float32) for _ in range(K)]  # shift_l
        + [pltpu.VMEM((1, hidden), jnp.float32),                    # acc_sum
           pltpu.VMEM((1, hidden), jnp.float32)]                    # acc_sq
    )

    grid_spec = pltpu.PrefetchScalarGridSpec(
        num_scalar_prefetch=0,
        grid=(K + 1, nt),
        in_specs=in_specs,
        out_specs=out_spec,
        scratch_shapes=scratch_shapes,
    )

    per_row_flops = 2 * (d_in * hidden + max(K - 1, 0) * hidden * hidden
                         + hidden * d_out)
    cost = pl.CostEstimate(
        flops=int((K + 1) * n_pad * per_row_flops),
        transcendentals=int((K + 1) * K * n_pad * hidden),
        bytes_accessed=int((K + 1) * n_pad * d_in * 4
                           + n_pad * d_out * 4 + param_bytes),
    )

    out_p = pl.pallas_call(
        make_fused_mlp_kernel(K, n, tn, n_pad),
        out_shape=jax.ShapeDtypeStruct((n_pad, d_out), jnp.float32),
        grid_spec=grid_spec,
        compiler_params=pltpu.CompilerParams(
            dimension_semantics=("arbitrary", "arbitrary"),
            vmem_limit_bytes=32 * 1024 * 1024,
        ),
        cost_estimate=cost,
    )(*args)

    if n_pad != n:
        out_p = out_p[:n]
    return out_p


# ---------------------------------------------------------------------------
# Deterministic parameter init (shapes follow nn.Linear / nn.BatchNorm1d)
# ---------------------------------------------------------------------------
def init_mlp_params(key, num_layers, input_dim, hidden_dim, output_dim):
    assert num_layers >= 2
    dims = [input_dim] + [hidden_dim] * (num_layers - 1) + [output_dim]
    linears, norms = [], []
    for l in range(num_layers):
        din, dout = dims[l], dims[l + 1]
        key, kw, kb = jax.random.split(key, 3)
        bound = 1.0 / (din ** 0.5)  # PyTorch default Linear init range
        w = jax.random.uniform(kw, (din, dout), jnp.float32, -bound, bound)
        b = jax.random.uniform(kb, (dout,), jnp.float32, -bound, bound)
        linears.append((w, b))
        if l < num_layers - 1:
            norms.append((jnp.ones((dout,), jnp.float32),    # BN weight
                          jnp.zeros((dout,), jnp.float32)))  # BN bias
    return {"linears": linears, "norms": norms}


# Pure-JAX reference (literal translation of the PyTorch forward, with bias).
def mlp_reference(x, params):
    h = x
    linears = params["linears"]
    norms = params["norms"]
    for layer in range(len(linears) - 1):
        w, b = linears[layer]
        gamma, beta = norms[layer]
        y = h @ w + b
        mean = jnp.mean(y, axis=0, keepdims=True)
        var = jnp.mean((y - mean) ** 2, axis=0, keepdims=True)
        z = (y - mean) / jnp.sqrt(var + _BN_EPS) * gamma + beta
        h = 0.5 * z * (1.0 + lax.erf(z * _INV_SQRT2))
    w, b = linears[-1]
    return h @ w + b


if __name__ == "__main__":
    # MLP(num_layers=3, input_dim=16, hidden_dim=32, output_dim=8,
    #     graph_norm=False, maxclause=*, maxvar=*): BatchNorm1d path.
    num_layers, input_dim, hidden_dim, output_dim = 3, 16, 32, 8
    batch = 100        # deliberately NOT a multiple of the tile -> mask path
    batch_tile = 32    # small tile so the batch grid / tiled BN is exercised

    key = jax.random.PRNGKey(0)
    key, kx = jax.random.split(key)
    x = jax.random.normal(kx, (batch, input_dim), jnp.float32)
    params = init_mlp_params(key, num_layers, input_dim, hidden_dim, output_dim)

    out = mlp_forward(x, params, batch_tile=batch_tile)
    out = jax.block_until_ready(out)

    ref = mlp_reference(x, params)
    assert out.shape == (batch, output_dim)
    assert jnp.allclose(out, ref, atol=1e-4, rtol=1e-4), \
        float(jnp.max(jnp.abs(out - ref)))

    print("KERNEL_OK")
</pallas_src>

<mosaic_0001>
module attributes {stable_mosaic.version = 11 : i64} {
  func.func @kernel(%arg0: i32, %arg1: i32, %arg2: memref<32x16xf32, #tpu.memory_space<vmem>>, %arg3: memref<16x32xf32, #tpu.memory_space<vmem>>, %arg4: memref<1x32xf32, #tpu.memory_space<vmem>>, %arg5: memref<1x32xf32, #tpu.memory_space<vmem>>, %arg6: memref<32x32xf32, #tpu.memory_space<vmem>>, %arg7: memref<1x32xf32, #tpu.memory_space<vmem>>, %arg8: memref<1x32xf32, #tpu.memory_space<vmem>>, %arg9: memref<32x8xf32, #tpu.memory_space<vmem>>, %arg10: memref<1x8xf32, #tpu.memory_space<vmem>>, %arg11: memref<32x8xf32, #tpu.memory_space<vmem>>, %arg12: memref<1x32xf32, #tpu.memory_space<vmem>>, %arg13: memref<1x32xf32, #tpu.memory_space<vmem>>, %arg14: memref<1x32xf32, #tpu.memory_space<vmem>>, %arg15: memref<1x32xf32, #tpu.memory_space<vmem>>, %arg16: memref<1x32xf32, #tpu.memory_space<vmem>>, %arg17: memref<1x32xf32, #tpu.memory_space<vmem>>) attributes {dimension_semantics = [#tpu.dimension_semantics<arbitrary>, #tpu.dimension_semantics<arbitrary>], iteration_bounds = array<i64: 3, 4>, scalar_prefetch = 0 : i64, scratch_operands = 6 : i64, tpu.core_type = #tpu.core_type<tc>, window_params = [{transform_indices = @transform_0, window_bounds = array<i64: 32, 16>}, {pipeline_mode = #tpu.pipeline_mode<synchronous>, transform_indices = @transform_1, window_bounds = array<i64: 16, 32>}, {pipeline_mode = #tpu.pipeline_mode<synchronous>, transform_indices = @transform_2, window_bounds = array<i64: 1, 32>}, {pipeline_mode = #tpu.pipeline_mode<synchronous>, transform_indices = @transform_3, window_bounds = array<i64: 1, 32>}, {pipeline_mode = #tpu.pipeline_mode<synchronous>, transform_indices = @transform_4, window_bounds = array<i64: 32, 32>}, {pipeline_mode = #tpu.pipeline_mode<synchronous>, transform_indices = @transform_5, window_bounds = array<i64: 1, 32>}, {pipeline_mode = #tpu.pipeline_mode<synchronous>, transform_indices = @transform_6, window_bounds = array<i64: 1, 32>}, {pipeline_mode = #tpu.pipeline_mode<synchronous>, transform_indices = @transform_7, window_bounds = array<i64: 32, 8>}, {pipeline_mode = #tpu.pipeline_mode<synchronous>, transform_indices = @transform_8, window_bounds = array<i64: 1, 8>}, {transform_indices = @transform_9, window_bounds = array<i64: 32, 8>}]} {
    %c0_i32 = arith.constant 0 : i32
    %0 = arith.cmpi eq, %arg0, %c0_i32 : i32
    %c0_i32_0 = arith.constant 0 : i32
    %1 = arith.cmpi eq, %arg1, %c0_i32_0 : i32
    %2 = arith.andi %0, %1 : i1
    %3 = arith.extui %2 : i1 to i32
    %c0_i32_1 = arith.constant 0 : i32
    %4 = arith.cmpi ne, %3, %c0_i32_1 : i32
    scf.if %4 {
      %cst_36 = arith.constant 1.000000e+00 : f32
      %77 = vector.broadcast %cst_36 : f32 to vector<1x32xf32>
      %c0_37 = arith.constant 0 : index
      %c0_38 = arith.constant 0 : index
      %78 = vector.load %arg12[%c0_37, %c0_38] : memref<1x32xf32, #tpu.memory_space<vmem>>, vector<1x32xf32>
      tpu.vector_store %arg12[%c0_37, %c0_38], %77 {strides = array<i32>} : memref<1x32xf32, #tpu.memory_space<vmem>>, vector<1x32xf32>,
      %cst_39 = arith.constant 0.000000e+00 : f32
      %79 = vector.broadcast %cst_39 : f32 to vector<1x32xf32>
      %c0_40 = arith.constant 0 : index
      %c0_41 = arith.constant 0 : index
      %80 = vector.load %arg14[%c0_40, %c0_41] : memref<1x32xf32, #tpu.memory_space<vmem>>, vector<1x32xf32>
      tpu.vector_store %arg14[%c0_40, %c0_41], %79 {strides = array<i32>} : memref<1x32xf32, #tpu.memory_space<vmem>>, vector<1x32xf32>,
      %cst_42 = arith.constant 1.000000e+00 : f32
      %81 = vector.broadcast %cst_42 : f32 to vector<1x32xf32>
      %c0_43 = arith.constant 0 : index
      %c0_44 = arith.constant 0 : index
      %82 = vector.load %arg13[%c0_43, %c0_44] : memref<1x32xf32, #tpu.memory_space<vmem>>, vector<1x32xf32>
      tpu.vector_store %arg13[%c0_43, %c0_44], %81 {strides = array<i32>} : memref<1x32xf32, #tpu.memory_space<vmem>>, vector<1x32xf32>,
      %cst_45 = arith.constant 0.000000e+00 : f32
      %83 = vector.broadcast %cst_45 : f32 to vector<1x32xf32>
      %c0_46 = arith.constant 0 : index
      %c0_47 = arith.constant 0 : index
      %84 = vector.load %arg15[%c0_46, %c0_47] : memref<1x32xf32, #tpu.memory_space<vmem>>, vector<1x32xf32>
      tpu.vector_store %arg15[%c0_46, %c0_47], %83 {strides = array<i32>} : memref<1x32xf32, #tpu.memory_space<vmem>>, vector<1x32xf32>,
    } else {
    }
    %c0_i32_2 = arith.constant 0 : i32
    %5 = arith.cmpi eq, %arg1, %c0_i32_2 : i32
    %c2_i32 = arith.constant 2 : i32
    %6 = arith.cmpi slt, %arg0, %c2_i32 : i32
    %7 = arith.andi %5, %6 : i1
    %8 = arith.extui %7 : i1 to i32
    %c0_i32_3 = arith.constant 0 : i32
    %9 = arith.cmpi ne, %8, %c0_i32_3 : i32
    scf.if %9 {
      %cst_36 = arith.constant 0.000000e+00 : f32
      %77 = vector.broadcast %cst_36 : f32 to vector<1x32xf32>
      %c0_37 = arith.constant 0 : index
      %c0_38 = arith.constant 0 : index
      %78 = vector.load %arg16[%c0_37, %c0_38] : memref<1x32xf32, #tpu.memory_space<vmem>>, vector<1x32xf32>
      tpu.vector_store %arg16[%c0_37, %c0_38], %77 {strides = array<i32>} : memref<1x32xf32, #tpu.memory_space<vmem>>, vector<1x32xf32>,
      %cst_39 = arith.constant 0.000000e+00 : f32
      %79 = vector.broadcast %cst_39 : f32 to vector<1x32xf32>
      %c0_40 = arith.constant 0 : index
      %c0_41 = arith.constant 0 : index
      %80 = vector.load %arg17[%c0_40, %c0_41] : memref<1x32xf32, #tpu.memory_space<vmem>>, vector<1x32xf32>
      tpu.vector_store %arg17[%c0_40, %c0_41], %79 {strides = array<i32>} : memref<1x32xf32, #tpu.memory_space<vmem>>, vector<1x32xf32>,
    } else {
    }
    %c32_i32 = arith.constant 32 : i32
    %10 = arith.muli %arg1, %c32_i32 : i32
    %11 = tpu.iota {dimensions = array<i32: 0>} : vector<32x1xi32>
    %12 = vector.broadcast %10 : i32 to vector<32x1xi32>
    %13 = arith.addi %12, %11 : vector<32x1xi32>
    %c100_i32 = arith.constant 100 : i32
    %14 = vector.broadcast %c100_i32 : i32 to vector<32x1xi32>
    %15 = arith.cmpi slt, %13, %14 : vector<32x1xi32>
    %16 = arith.extui %15 : vector<32x1xi1> to vector<32x1xi32>
    %17 = arith.sitofp %16 : vector<32x1xi32> to vector<32x1xf32>
    %c0 = arith.constant 0 : index
    %c0_4 = arith.constant 0 : index
    %18 = vector.load %arg2[%c0, %c0_4] : memref<32x16xf32, #tpu.memory_space<vmem>>, vector<32x16xf32>
    %c0_5 = arith.constant 0 : index
    %c0_6 = arith.constant 0 : index
    %19 = vector.load %arg3[%c0_5, %c0_6] : memref<16x32xf32, #tpu.memory_space<vmem>>, vector<16x32xf32>
    %cst = arith.constant dense<0.000000e+00> : vector<32x32xf32>
    %20 = tpu.matmul %18, %19, %cst {dimension_numbers = #tpu.dot_dimension_numbers<[1], [0], [0], [1], [0, 0, 1, 1], [], []>} : vector<32x16xf32>, vector<16x32xf32>, vector<32x32xf32> -> vector<32x32xf32>
    %c0_i32_7 = arith.constant 0 : i32
    %21 = arith.cmpi eq, %arg0, %c0_i32_7 : i32
    %22 = arith.extui %21 : i1 to i32
    %c0_i32_8 = arith.constant 0 : i32
    %23 = arith.cmpi ne, %22, %c0_i32_8 : i32
    scf.if %23 {
      %c0_36 = arith.constant 0 : index
      %c0_37 = arith.constant 0 : index
      %77 = vector.load %arg16[%c0_36, %c0_37] : memref<1x32xf32, #tpu.memory_space<vmem>>, vector<1x32xf32>
      %cst_38 = arith.constant dense<0.000000e+00> : vector<32xf32>
      %78 = vector.multi_reduction <add>, %20, %cst_38 [0] : vector<32x32xf32> to vector<32xf32>
      %79 = vector.shape_cast %78 : vector<32xf32> to vector<1x32xf32>
      %80 = arith.addf %77, %79 : vector<1x32xf32>
      %c0_39 = arith.constant 0 : index
      %c0_40 = arith.constant 0 : index
      %81 = vector.load %arg16[%c0_39, %c0_40] : memref<1x32xf32, #tpu.memory_space<vmem>>, vector<1x32xf32>
      tpu.vector_store %arg16[%c0_39, %c0_40], %80 {strides = array<i32>} : memref<1x32xf32, #tpu.memory_space<vmem>>, vector<1x32xf32>,
      %c0_41 = arith.constant 0 : index
      %c0_42 = arith.constant 0 : index
      %82 = vector.load %arg17[%c0_41, %c0_42] : memref<1x32xf32, #tpu.memory_space<vmem>>, vector<1x32xf32>
      %83 = arith.mulf %20, %20 : vector<32x32xf32>
      %cst_43 = arith.constant dense<0.000000e+00> : vector<32xf32>
      %84 = vector.multi_reduction <add>, %83, %cst_43 [0] : vector<32x32xf32> to vector<32xf32>
      %85 = vector.shape_cast %84 : vector<32xf32> to vector<1x32xf32>
      %86 = arith.addf %82, %85 : vector<1x32xf32>
      %c0_44 = arith.constant 0 : index
      %c0_45 = arith.constant 0 : index
      %87 = vector.load %arg17[%c0_44, %c0_45] : memref<1x32xf32, #tpu.memory_space<vmem>>, vector<1x32xf32>
      tpu.vector_store %arg17[%c0_44, %c0_45], %86 {strides = array<i32>} : memref<1x32xf32, #tpu.memory_space<vmem>>, vector<1x32xf32>,
    } else {
    }
    %c0_i32_9 = arith.constant 0 : i32
    %24 = arith.cmpi eq, %arg0, %c0_i32_9 : i32
    %c3_i32 = arith.constant 3 : i32
    %25 = arith.cmpi eq, %arg1, %c3_i32 : i32
    %26 = arith.andi %24, %25 : i1
    %27 = arith.extui %26 : i1 to i32
    %c0_i32_10 = arith.constant 0 : i32
    %28 = arith.cmpi ne, %27, %c0_i32_10 : i32
    scf.if %28 {
      %c0_36 = arith.constant 0 : index
      %c0_37 = arith.constant 0 : index
      %77 = vector.load %arg16[%c0_36, %c0_37] : memref<1x32xf32, #tpu.memory_space<vmem>>, vector<1x32xf32>
      %cst_38 = arith.constant 0.00999999977 : f32
      %78 = vector.broadcast %cst_38 : f32 to vector<1x32xf32>
      %79 = arith.mulf %77, %78 : vector<1x32xf32>
      %c0_39 = arith.constant 0 : index
      %c0_40 = arith.constant 0 : index
      %80 = vector.load %arg17[%c0_39, %c0_40] : memref<1x32xf32, #tpu.memory_space<vmem>>, vector<1x32xf32>
      %cst_41 = arith.constant 0.00999999977 : f32
      %81 = vector.broadcast %cst_41 : f32 to vector<1x32xf32>
      %82 = arith.mulf %80, %81 : vector<1x32xf32>
      %83 = arith.mulf %79, %79 : vector<1x32xf32>
      %84 = arith.subf %82, %83 : vector<1x32xf32>
      %cst_42 = arith.constant 0.000000e+00 : f32
      %85 = vector.broadcast %cst_42 : f32 to vector<1x32xf32>
      %86 = arith.maximumf %84, %85 : vector<1x32xf32>
      %c0_43 = arith.constant 0 : index
      %c0_44 = arith.constant 0 : index
      %87 = vector.load %arg4[%c0_43, %c0_44] : memref<1x32xf32, #tpu.memory_space<vmem>>, vector<1x32xf32>
      %cst_45 = arith.constant 9.99999974E-6 : f32
      %88 = vector.broadcast %cst_45 : f32 to vector<1x32xf32>
      %89 = arith.addf %86, %88 : vector<1x32xf32>
      %90 = math.rsqrt %89 : vector<1x32xf32>
      %91 = arith.mulf %87, %90 : vector<1x32xf32>
      %c0_46 = arith.constant 0 : index
      %c0_47 = arith.constant 0 : index
      %92 = vector.load %arg12[%c0_46, %c0_47] : memref<1x32xf32, #tpu.memory_space<vmem>>, vector<1x32xf32>
      tpu.vector_store %arg12[%c0_46, %c0_47], %91 {strides = array<i32>} : memref<1x32xf32, #tpu.memory_space<vmem>>, vector<1x32xf32>,
      %c0_48 = arith.constant 0 : index
      %c0_49 = arith.constant 0 : index
      %93 = vector.load %arg5[%c0_48, %c0_49] : memref<1x32xf32, #tpu.memory_space<vmem>>, vector<1x32xf32>
      %94 = arith.mulf %79, %91 : vector<1x32xf32>
      %95 = arith.subf %93, %94 : vector<1x32xf32>
      %c0_50 = arith.constant 0 : index
      %c0_51 = arith.constant 0 : index
      %96 = vector.load %arg14[%c0_50, %c0_51] : memref<1x32xf32, #tpu.memory_space<vmem>>, vector<1x32xf32>
      tpu.vector_store %arg14[%c0_50, %c0_51], %95 {strides = array<i32>} : memref<1x32xf32, #tpu.memory_space<vmem>>, vector<1x32xf32>,
    } else {
    }
    %c0_11 = arith.constant 0 : index
    %c0_12 = arith.constant 0 : index
    %29 = vector.load %arg12[%c0_11, %c0_12] : memref<1x32xf32, #tpu.memory_space<vmem>>, vector<1x32xf32>
    %30 = vector.broadcast %29 : vector<1x32xf32> to vector<32x32xf32>
    %31 = arith.mulf %20, %30 : vector<32x32xf32>
    %c0_13 = arith.constant 0 : index
    %c0_14 = arith.constant 0 : index
    %32 = vector.load %arg14[%c0_13, %c0_14] : memref<1x32xf32, #tpu.memory_space<vmem>>, vector<1x32xf32>
    %33 = vector.broadcast %32 : vector<1x32xf32> to vector<32x32xf32>
    %34 = arith.addf %31, %33 : vector<32x32xf32>
    %cst_15 = arith.constant 5.000000e-01 : f32
    %35 = vector.broadcast %cst_15 : f32 to vector<32x32xf32>
    %36 = arith.mulf %35, %34 : vector<32x32xf32>
    %cst_16 = arith.constant 0.707106769 : f32
    %37 = vector.broadcast %cst_16 : f32 to vector<32x32xf32>
    %38 = arith.mulf %34, %37 : vector<32x32xf32>
    %39 = math.erf %38 : vector<32x32xf32>
    %cst_17 = arith.constant 1.000000e+00 : f32
    %40 = vector.broadcast %cst_17 : f32 to vector<32x32xf32>
    %41 = arith.addf %40, %39 : vector<32x32xf32>
    %42 = arith.mulf %36, %41 : vector<32x32xf32>
    %43 = vector.broadcast %17 : vector<32x1xf32> to vector<32x32xf32>
    %44 = arith.mulf %42, %43 : vector<32x32xf32>
    %c0_18 = arith.constant 0 : index
    %c0_19 = arith.constant 0 : index
    %45 = vector.load %arg6[%c0_18, %c0_19] : memref<32x32xf32, #tpu.memory_space<vmem>>, vector<32x32xf32>
    %cst_20 = arith.constant dense<0.000000e+00> : vector<32x32xf32>
    %46 = tpu.matmul %44, %45, %cst_20 {dimension_numbers = #tpu.dot_dimension_numbers<[1], [0], [0], [1], [0, 0, 1, 1], [], []>} : vector<32x32xf32>, vector<32x32xf32>, vector<32x32xf32> -> vector<32x32xf32>
    %c1_i32 = arith.constant 1 : i32
    %47 = arith.cmpi eq, %arg0, %c1_i32 : i32
    %48 = arith.extui %47 : i1 to i32
    %c0_i32_21 = arith.constant 0 : i32
    %49 = arith.cmpi ne, %48, %c0_i32_21 : i32
    scf.if %49 {
      %c0_36 = arith.constant 0 : index
      %c0_37 = arith.constant 0 : index
      %77 = vector.load %arg16[%c0_36, %c0_37] : memref<1x32xf32, #tpu.memory_space<vmem>>, vector<1x32xf32>
      %cst_38 = arith.constant dense<0.000000e+00> : vector<32xf32>
      %78 = vector.multi_reduction <add>, %46, %cst_38 [0] : vector<32x32xf32> to vector<32xf32>
      %79 = vector.shape_cast %78 : vector<32xf32> to vector<1x32xf32>
      %80 = arith.addf %77, %79 : vector<1x32xf32>
      %c0_39 = arith.constant 0 : index
      %c0_40 = arith.constant 0 : index
      %81 = vector.load %arg16[%c0_39, %c0_40] : memref<1x32xf32, #tpu.memory_space<vmem>>, vector<1x32xf32>
      tpu.vector_store %arg16[%c0_39, %c0_40], %80 {strides = array<i32>} : memref<1x32xf32, #tpu.memory_space<vmem>>, vector<1x32xf32>,
      %c0_41 = arith.constant 0 : index
      %c0_42 = arith.constant 0 : index
      %82 = vector.load %arg17[%c0_41, %c0_42] : memref<1x32xf32, #tpu.memory_space<vmem>>, vector<1x32xf32>
      %83 = arith.mulf %46, %46 : vector<32x32xf32>
      %cst_43 = arith.constant dense<0.000000e+00> : vector<32xf32>
      %84 = vector.multi_reduction <add>, %83, %cst_43 [0] : vector<32x32xf32> to vector<32xf32>
      %85 = vector.shape_cast %84 : vector<32xf32> to vector<1x32xf32>
      %86 = arith.addf %82, %85 : vector<1x32xf32>
      %c0_44 = arith.constant 0 : index
      %c0_45 = arith.constant 0 : index
      %87 = vector.load %arg17[%c0_44, %c0_45] : memref<1x32xf32, #tpu.memory_space<vmem>>, vector<1x32xf32>
      tpu.vector_store %arg17[%c0_44, %c0_45], %86 {strides = array<i32>} : memref<1x32xf32, #tpu.memory_space<vmem>>, vector<1x32xf32>,
    } else {
    }
    %c1_i32_22 = arith.constant 1 : i32
    %50 = arith.cmpi eq, %arg0, %c1_i32_22 : i32
    %c3_i32_23 = arith.constant 3 : i32
    %51 = arith.cmpi eq, %arg1, %c3_i32_23 : i32
    %52 = arith.andi %50, %51 : i1
    %53 = arith.extui %52 : i1 to i32
    %c0_i32_24 = arith.constant 0 : i32
    %54 = arith.cmpi ne, %53, %c0_i32_24 : i32
    scf.if %54 {
      %c0_36 = arith.constant 0 : index
      %c0_37 = arith.constant 0 : index
      %77 = vector.load %arg16[%c0_36, %c0_37] : memref<1x32xf32, #tpu.memory_space<vmem>>, vector<1x32xf32>
      %cst_38 = arith.constant 0.00999999977 : f32
      %78 = vector.broadcast %cst_38 : f32 to vector<1x32xf32>
      %79 = arith.mulf %77, %78 : vector<1x32xf32>
      %c0_39 = arith.constant 0 : index
      %c0_40 = arith.constant 0 : index
      %80 = vector.load %arg17[%c0_39, %c0_40] : memref<1x32xf32, #tpu.memory_space<vmem>>, vector<1x32xf32>
      %cst_41 = arith.constant 0.00999999977 : f32
      %81 = vector.broadcast %cst_41 : f32 to vector<1x32xf32>
      %82 = arith.mulf %80, %81 : vector<1x32xf32>
      %83 = arith.mulf %79, %79 : vector<1x32xf32>
      %84 = arith.subf %82, %83 : vector<1x32xf32>
      %cst_42 = arith.constant 0.000000e+00 : f32
      %85 = vector.broadcast %cst_42 : f32 to vector<1x32xf32>
      %86 = arith.maximumf %84, %85 : vector<1x32xf32>
      %c0_43 = arith.constant 0 : index
      %c0_44 = arith.constant 0 : index
      %87 = vector.load %arg7[%c0_43, %c0_44] : memref<1x32xf32, #tpu.memory_space<vmem>>, vector<1x32xf32>
      %cst_45 = arith.constant 9.99999974E-6 : f32
      %88 = vector.broadcast %cst_45 : f32 to vector<1x32xf32>
      %89 = arith.addf %86, %88 : vector<1x32xf32>
      %90 = math.rsqrt %89 : vector<1x32xf32>
      %91 = arith.mulf %87, %90 : vector<1x32xf32>
      %c0_46 = arith.constant 0 : index
      %c0_47 = arith.constant 0 : index
      %92 = vector.load %arg13[%c0_46, %c0_47] : memref<1x32xf32, #tpu.memory_space<vmem>>, vector<1x32xf32>
      tpu.vector_store %arg13[%c0_46, %c0_47], %91 {strides = array<i32>} : memref<1x32xf32, #tpu.memory_space<vmem>>, vector<1x32xf32>,
      %c0_48 = arith.constant 0 : index
      %c0_49 = arith.constant 0 : index
      %93 = vector.load %arg8[%c0_48, %c0_49] : memref<1x32xf32, #tpu.memory_space<vmem>>, vector<1x32xf32>
      %94 = arith.mulf %79, %91 : vector<1x32xf32>
      %95 = arith.subf %93, %94 : vector<1x32xf32>
      %c0_50 = arith.constant 0 : index
      %c0_51 = arith.constant 0 : index
      %96 = vector.load %arg15[%c0_50, %c0_51] : memref<1x32xf32, #tpu.memory_space<vmem>>, vector<1x32xf32>
      tpu.vector_store %arg15[%c0_50, %c0_51], %95 {strides = array<i32>} : memref<1x32xf32, #tpu.memory_space<vmem>>, vector<1x32xf32>,
    } else {
    }
    %c0_25 = arith.constant 0 : index
    %c0_26 = arith.constant 0 : index
    %55 = vector.load %arg13[%c0_25, %c0_26] : memref<1x32xf32, #tpu.memory_space<vmem>>, vector<1x32xf32>
    %56 = vector.broadcast %55 : vector<1x32xf32> to vector<32x32xf32>
    %57 = arith.mulf %46, %56 : vector<32x32xf32>
    %c0_27 = arith.constant 0 : index
    %c0_28 = arith.constant 0 : index
    %58 = vector.load %arg15[%c0_27, %c0_28] : memref<1x32xf32, #tpu.memory_space<vmem>>, vector<1x32xf32>
    %59 = vector.broadcast %58 : vector<1x32xf32> to vector<32x32xf32>
    %60 = arith.addf %57, %59 : vector<32x32xf32>
    %cst_29 = arith.constant 5.000000e-01 : f32
    %61 = vector.broadcast %cst_29 : f32 to vector<32x32xf32>
    %62 = arith.mulf %61, %60 : vector<32x32xf32>
    %cst_30 = arith.constant 0.707106769 : f32
    %63 = vector.broadcast %cst_30 : f32 to vector<32x32xf32>
    %64 = arith.mulf %60, %63 : vector<32x32xf32>
    %65 = math.erf %64 : vector<32x32xf32>
    %cst_31 = arith.constant 1.000000e+00 : f32
    %66 = vector.broadcast %cst_31 : f32 to vector<32x32xf32>
    %67 = arith.addf %66, %65 : vector<32x32xf32>
    %68 = arith.mulf %62, %67 : vector<32x32xf32>
    %69 = vector.broadcast %17 : vector<32x1xf32> to vector<32x32xf32>
    %70 = arith.mulf %68, %69 : vector<32x32xf32>
    %c2_i32_32 = arith.constant 2 : i32
    %71 = arith.cmpi slt, %arg0, %c2_i32_32 : i32
    %72 = arith.extui %71 : i1 to i32
    %c0_i32_33 = arith.constant 0 : i32
    %73 = arith.cmpi ne, %72, %c0_i32_33 : i32
    scf.if %73 {
      %cst_36 = arith.constant 0.000000e+00 : f32
      %77 = vector.broadcast %cst_36 : f32 to vector<32x8xf32>
      %c0_37 = arith.constant 0 : index
      %c0_38 = arith.constant 0 : index
      %78 = vector.load %arg11[%c0_37, %c0_38] : memref<32x8xf32, #tpu.memory_space<vmem>>, vector<32x8xf32>
      tpu.vector_store %arg11[%c0_37, %c0_38], %77 {strides = array<i32>} : memref<32x8xf32, #tpu.memory_space<vmem>>, vector<32x8xf32>,
    } else {
    }
    %c2_i32_34 = arith.constant 2 : i32
    %74 = arith.cmpi eq, %arg0, %c2_i32_34 : i32
    %75 = arith.extui %74 : i1 to i32
    %c0_i32_35 = arith.constant 0 : i32
    %76 = arith.cmpi ne, %75, %c0_i32_35 : i32
    scf.if %76 {
      %c0_36 = arith.constant 0 : index
      %c0_37 = arith.constant 0 : index
      %77 = vector.load %arg9[%c0_36, %c0_37] : memref<32x8xf32, #tpu.memory_space<vmem>>, vector<32x8xf32>
      %cst_38 = arith.constant dense<0.000000e+00> : vector<32x8xf32>
      %78 = tpu.matmul %70, %77, %cst_38 {dimension_numbers = #tpu.dot_dimension_numbers<[1], [0], [0], [1], [0, 0, 1, 1], [], []>} : vector<32x32xf32>, vector<32x8xf32>, vector<32x8xf32> -> vector<32x8xf32>
      %c0_39 = arith.constant 0 : index
      %c0_40 = arith.constant 0 : index
      %79 = vector.load %arg10[%c0_39, %c0_40] : memref<1x8xf32, #tpu.memory_space<vmem>>, vector<1x8xf32>
      %80 = vector.broadcast %79 : vector<1x8xf32> to vector<32x8xf32>
      %81 = arith.addf %78, %80 : vector<32x8xf32>
      %c0_41 = arith.constant 0 : index
      %c0_42 = arith.constant 0 : index
      %82 = vector.load %arg11[%c0_41, %c0_42] : memref<32x8xf32, #tpu.memory_space<vmem>>, vector<32x8xf32>
      tpu.vector_store %arg11[%c0_41, %c0_42], %81 {strides = array<i32>} : memref<32x8xf32, #tpu.memory_space<vmem>>, vector<32x8xf32>,
    } else {
    }
    return
  }
  func.func @transform_0(%arg0: i32, %arg1: i32) -> (i32, i32) {
    %c0_i32 = arith.constant 0 : i32
    %c0_i32_0 = arith.constant 0 : i32
    return %arg1, %c0_i32 : i32, i32
  }
  func.func @transform_1(%arg0: i32, %arg1: i32) -> (i32, i32) {
    %c0_i32 = arith.constant 0 : i32
    %c0_i32_0 = arith.constant 0 : i32
    %c0_i32_1 = arith.constant 0 : i32
    return %c0_i32, %c0_i32_0 : i32, i32
  }
  func.func @transform_2(%arg0: i32, %arg1: i32) -> (i32, i32) {
    %c0_i32 = arith.constant 0 : i32
    %c0_i32_0 = arith.constant 0 : i32
    %c0_i32_1 = arith.constant 0 : i32
    return %c0_i32, %c0_i32_0 : i32, i32
  }
  func.func @transform_3(%arg0: i32, %arg1: i32) -> (i32, i32) {
    %c0_i32 = arith.constant 0 : i32
    %c0_i32_0 = arith.constant 0 : i32
    %c0_i32_1 = arith.constant 0 : i32
    return %c0_i32, %c0_i32_0 : i32, i32
  }
  func.func @transform_4(%arg0: i32, %arg1: i32) -> (i32, i32) {
    %c0_i32 = arith.constant 0 : i32
    %c0_i32_0 = arith.constant 0 : i32
    %c0_i32_1 = arith.constant 0 : i32
    return %c0_i32, %c0_i32_0 : i32, i32
  }
  func.func @transform_5(%arg0: i32, %arg1: i32) -> (i32, i32) {
    %c0_i32 = arith.constant 0 : i32
    %c0_i32_0 = arith.constant 0 : i32
    %c0_i32_1 = arith.constant 0 : i32
    return %c0_i32, %c0_i32_0 : i32, i32
  }
  func.func @transform_6(%arg0: i32, %arg1: i32) -> (i32, i32) {
    %c0_i32 = arith.constant 0 : i32
    %c0_i32_0 = arith.constant 0 : i32
    %c0_i32_1 = arith.constant 0 : i32
    return %c0_i32, %c0_i32_0 : i32, i32
  }
  func.func @transform_7(%arg0: i32, %arg1: i32) -> (i32, i32) {
    %c0_i32 = arith.constant 0 : i32
    %c0_i32_0 = arith.constant 0 : i32
    %c0_i32_1 = arith.constant 0 : i32
    return %c0_i32, %c0_i32_0 : i32, i32
  }
  func.func @transform_8(%arg0: i32, %arg1: i32) -> (i32, i32) {
    %c0_i32 = arith.constant 0 : i32
    %c0_i32_0 = arith.constant 0 : i32
    %c0_i32_1 = arith.constant 0 : i32
    return %c0_i32, %c0_i32_0 : i32, i32
  }
  func.func @transform_9(%arg0: i32, %arg1: i32) -> (i32, i32) {
    %c0_i32 = arith.constant 0 : i32
    %c0_i32_0 = arith.constant 0 : i32
    return %arg1, %c0_i32 : i32, i32
  }
}

</mosaic_0001>

<llo_original>
// kernel: tpu_custom_call.1
$region0: #{tpu_custom_call.1}
  #allocation0 [shape = 'u32[]', space=smem, size = 0x4, offset = 0x4, fixed_abs, tag = 'smem constant byte address 0x4 - core index']
  #allocation1 [shape = 'u32[144,128]{1,0:T(1,128)}', space=vmem, size = 0x12000, scoped, tag = 'internal scratch']
  #allocation2 [shape = 'f32[1,32]{1,0:T(1,128)}', space=vmem, size = 0x200, scoped, tag = 'scratch operand']
  #allocation3 [shape = 'f32[1,32]{1,0:T(1,128)}', space=vmem, size = 0x200, scoped, tag = 'scratch operand']
  #allocation4 [shape = 'f32[1,32]{1,0:T(1,128)}', space=vmem, size = 0x200, scoped, tag = 'scratch operand']
  #allocation5 [shape = 'f32[1,32]{1,0:T(1,128)}', space=vmem, size = 0x200, scoped, tag = 'scratch operand']
  #allocation6 [shape = 'f32[1,32]{1,0:T(1,128)}', space=vmem, size = 0x200, scoped, tag = 'scratch operand']
  #allocation7 [shape = 'f32[1,32]{1,0:T(1,128)}', space=vmem, size = 0x200, scoped, tag = 'scratch operand']
  %s0 = inlined_call_operand.vmem [shape: f32[128,16], index: 0, kind: input, shape index: {}]
  %s1 = inlined_call_operand.vmem [shape: f32[16,32], index: 1, kind: input, shape index: {}]
  %s2 = inlined_call_operand.vmem [shape: f32[1,32], index: 2, kind: input, shape index: {}]
  %s3 = inlined_call_operand.vmem [shape: f32[1,32], index: 3, kind: input, shape index: {}]
  %s4 = inlined_call_operand.vmem [shape: f32[32,32], index: 4, kind: input, shape index: {}]
  %s5 = inlined_call_operand.vmem [shape: f32[1,32], index: 5, kind: input, shape index: {}]
  %s6 = inlined_call_operand.vmem [shape: f32[1,32], index: 6, kind: input, shape index: {}]
  %s7 = inlined_call_operand.vmem [shape: f32[32,8], index: 7, kind: input, shape index: {}]
  %s8 = inlined_call_operand.vmem [shape: f32[1,8], index: 8, kind: input, shape index: {}]
  %s9 = inlined_call_operand.vmem [shape: f32[128,8], index: 9, kind: output, shape index: {}]
  %s10 = sld [smem:[#allocation0]]
  $region101: #{tpu_custom_call.1} parent=0
    _
  %s12 = ssub.s32 1, %s10
  %s13 = scalar_select 0, %s12, %s10
  loop: start=0, step=1, limit=14
  $region2: #{tpu_custom_call.1} parent=0 // loop_pre_header
    _
  $region3: #{tpu_custom_call.1} parent=0 // loop_header
    %s15 = sphi 0, %s19
    %p16 = scmp.ge.s32.totalorder %s15, 14
    %s22 = sphi 0, %s34
    %s23 = sphi 0, %s30
    %s24 = sphi 0, %s22
    %s25 = sphi 0, %s23
    %s26 = sphi 0, %s24
    %s27 = sphi 0, %s25
    %s37 = sphi 0, %s39
    %s40 = sphi 0, %s37
    %s41 = sphi 0, %s40
    %s57 = sphi 0, %s41
    %s61 = sphi 0, %s61
    %s63 = sphi 0, %s61
    %s64 = sphi 0, %s63
    %s78 = sphi 0, %s64
    %s82 = sphi 0, %s82
    %s84 = sphi 0, %s82
    %s85 = sphi 0, %s84
    %s99 = sphi 0, %s85
    %s103 = sphi 0, %s103
    %s105 = sphi 0, %s103
    %s106 = sphi 0, %s105
    %s120 = sphi 0, %s106
    %s124 = sphi 0, %s124
    %s126 = sphi 0, %s124
    %s127 = sphi 0, %s126
    %s141 = sphi 0, %s127
    %s145 = sphi 0, %s145
    %s147 = sphi 0, %s145
    %s148 = sphi 0, %s147
    %s162 = sphi 0, %s148
    %s166 = sphi 0, %s166
    %s168 = sphi 0, %s166
    %s169 = sphi 0, %s168
    %s183 = sphi 0, %s169
    %s187 = sphi 0, %s187
    %s189 = sphi 0, %s187
    %s190 = sphi 0, %s189
    %s204 = sphi 0, %s190
    %s208 = sphi 0, %s208
    %s210 = sphi 0, %s208
    %s211 = sphi 0, %s210
    %s225 = sphi 0, %s211
    %s231 = sphi 0, %s233
    %s234 = sphi 0, %s231
    %s235 = sphi 0, %s234
    %s251 = sphi 0, %s235
  $region4: #{tpu_custom_call.1} parent=0 // loop_header_branch
    %18 = sbr.rel (%p16) target = $region8
  $region5: #{tpu_custom_call.1} parent=0 // loop_body
    %s20 = ssub.s32 %s15, 1
    %s21 = ssub.s32 %s15, 2
    %s28 = sadd.s32 1, %s23
    %p29 = scmp.ge.s32.totalorder %s28, 4
    %s30 = scalar_select %p29, 0, %s28
    %s31 = sadd.s32 1, %s22
    %s32 = scalar_select %p29, %s31, %s22
    %p33 = scmp.ge.s32.totalorder %s32, 3
    %s34 = scalar_select %p33, 0, %s32
    %s35 = ssub.s32 %s23, %s30
    %p36 = scmp.eq.s32.totalorder %s35, 0
    %s38 = sadd.s32 %s37, 1
    %s39 = scalar_select %p36, %s37, %s38
    %p42 = pneg %p36
    %p43 = scmp.eq.s32.totalorder %s15, 11
    %p44 = por %p42, %p43
    %p45 = scmp.ne.s32.totalorder %s37, %s40
    %p46 = scmp.eq.s32.totalorder %s15, 0
    %p47 = por %p45, %p46
    %p48 = scmp.ne.s32.totalorder %s37, %s40
    %p49 = scmp.eq.s32.totalorder %s20, 11
    %p50 = por %p48, %p49
    %p51 = scmp.ne.s32.totalorder %s40, %s41
    %p52 = scmp.eq.s32.totalorder %s20, 0
    %p53 = por %p51, %p52
    %p54 = scmp.ne.s32.totalorder %s40, %s41
    %p55 = scmp.eq.s32.totalorder %s21, 11
    %p56 = por %p54, %p55
    %p58 = scmp.ne.s32.totalorder %s41, %s57
    %p59 = scmp.eq.s32.totalorder %s21, 0
    %p60 = por %p58, %p59
    %s62 = sadd.s32 %s61, 1
    %p65 = scmp.eq.s32.totalorder %s15, 11
    %p66 = scmp.ne.s32.totalorder %s61, %s63
    %p67 = scmp.eq.s32.totalorder %s15, 0
    %p68 = por %p66, %p67
    %p69 = scmp.ne.s32.totalorder %s61, %s63
    %p70 = scmp.eq.s32.totalorder %s20, 11
    %p71 = por %p69, %p70
    %p72 = scmp.ne.s32.totalorder %s63, %s64
    %p73 = scmp.eq.s32.totalorder %s20, 0
    %p74 = por %p72, %p73
    %p75 = scmp.ne.s32.totalorder %s63, %s64
    %p76 = scmp.eq.s32.totalorder %s21, 11
    %p77 = por %p75, %p76
    %p79 = scmp.ne.s32.totalorder %s64, %s78
    %p80 = scmp.eq.s32.totalorder %s21, 0
    %p81 = por %p79, %p80
    %s83 = sadd.s32 %s82, 1
    %p86 = scmp.eq.s32.totalorder %s15, 11
    %p87 = scmp.ne.s32.totalorder %s82, %s84
    %p88 = scmp.eq.s32.totalorder %s15, 0
    %p89 = por %p87, %p88
    %p90 = scmp.ne.s32.totalorder %s82, %s84
    %p91 = scmp.eq.s32.totalorder %s20, 11
    %p92 = por %p90, %p91
    %p93 = scmp.ne.s32.totalorder %s84, %s85
    %p94 = scmp.eq.s32.totalorder %s20, 0
    %p95 = por %p93, %p94
    %p96 = scmp.ne.s32.totalorder %s84, %s85
    %p97 = scmp.eq.s32.totalorder %s21, 11
    %p98 = por %p96, %p97
    %p100 = scmp.ne.s32.totalorder %s85, %s99
    %p101 = scmp.eq.s32.totalorder %s21, 0
    %p102 = por %p100, %p101
    %s104 = sadd.s32 %s103, 1
    %p107 = scmp.eq.s32.totalorder %s15, 11
    %p108 = scmp.ne.s32.totalorder %s103, %s105
    %p109 = scmp.eq.s32.totalorder %s15, 0
    %p110 = por %p108, %p109
    %p111 = scmp.ne.s32.totalorder %s103, %s105
    %p112 = scmp.eq.s32.totalorder %s20, 11
    %p113 = por %p111, %p112
    %p114 = scmp.ne.s32.totalorder %s105, %s106
    %p115 = scmp.eq.s32.totalorder %s20, 0
    %p116 = por %p114, %p115
    %p117 = scmp.ne.s32.totalorder %s105, %s106
    %p118 = scmp.eq.s32.totalorder %s21, 11
    %p119 = por %p117, %p118
    %p121 = scmp.ne.s32.totalorder %s106, %s120
    %p122 = scmp.eq.s32.totalorder %s21, 0
    %p123 = por %p121, %p122
    %s125 = sadd.s32 %s124, 1
    %p128 = scmp.eq.s32.totalorder %s15, 11
    %p129 = scmp.ne.s32.totalorder %s124, %s126
    %p130 = scmp.eq.s32.totalorder %s15, 0
    %p131 = por %p129, %p130
    %p132 = scmp.ne.s32.totalorder %s124, %s126
    %p133 = scmp.eq.s32.totalorder %s20, 11
    %p134 = por %p132, %p133
    %p135 = scmp.ne.s32.totalorder %s126, %s127
    %p136 = scmp.eq.s32.totalorder %s20, 0
    %p137 = por %p135, %p136
    %p138 = scmp.ne.s32.totalorder %s126, %s127
    %p139 = scmp.eq.s32.totalorder %s21, 11
    %p140 = por %p138, %p139
    %p142 = scmp.ne.s32.totalorder %s127, %s141
    %p143 = scmp.eq.s32.totalorder %s21, 0
    %p144 = por %p142, %p143
    %s146 = sadd.s32 %s145, 1
    %p149 = scmp.eq.s32.totalorder %s15, 11
    %p150 = scmp.ne.s32.totalorder %s145, %s147
    %p151 = scmp.eq.s32.totalorder %s15, 0
    %p152 = por %p150, %p151
    %p153 = scmp.ne.s32.totalorder %s145, %s147
    %p154 = scmp.eq.s32.totalorder %s20, 11
    %p155 = por %p153, %p154
    %p156 = scmp.ne.s32.totalorder %s147, %s148
    %p157 = scmp.eq.s32.totalorder %s20, 0
    %p158 = por %p156, %p157
    %p159 = scmp.ne.s32.totalorder %s147, %s148
    %p160 = scmp.eq.s32.totalorder %s21, 11
    %p161 = por %p159, %p160
    %p163 = scmp.ne.s32.totalorder %s148, %s162
    %p164 = scmp.eq.s32.totalorder %s21, 0
    %p165 = por %p163, %p164
    %s167 = sadd.s32 %s166, 1
    %p170 = scmp.eq.s32.totalorder %s15, 11
    %p171 = scmp.ne.s32.totalorder %s166, %s168
    %p172 = scmp.eq.s32.totalorder %s15, 0
    %p173 = por %p171, %p172
    %p174 = scmp.ne.s32.totalorder %s166, %s168
    %p175 = scmp.eq.s32.totalorder %s20, 11
    %p176 = por %p174, %p175
    %p177 = scmp.ne.s32.totalorder %s168, %s169
    %p178 = scmp.eq.s32.totalorder %s20, 0
    %p179 = por %p177, %p178
    %p180 = scmp.ne.s32.totalorder %s168, %s169
    %p181 = scmp.eq.s32.totalorder %s21, 11
    %p182 = por %p180, %p181
    %p184 = scmp.ne.s32.totalorder %s169, %s183
    %p185 = scmp.eq.s32.totalorder %s21, 0
    %p186 = por %p184, %p185
    %s188 = sadd.s32 %s187, 1
    %p191 = scmp.eq.s32.totalorder %s15, 11
    %p192 = scmp.ne.s32.totalorder %s187, %s189
    %p193 = scmp.eq.s32.totalorder %s15, 0
    %p194 = por %p192, %p193
    %p195 = scmp.ne.s32.totalorder %s187, %s189
    %p196 = scmp.eq.s32.totalorder %s20, 11
    %p197 = por %p195, %p196
    %p198 = scmp.ne.s32.totalorder %s189, %s190
    %p199 = scmp.eq.s32.totalorder %s20, 0
    %p200 = por %p198, %p199
    %p201 = scmp.ne.s32.totalorder %s189, %s190
    %p202 = scmp.eq.s32.totalorder %s21, 11
    %p203 = por %p201, %p202
    %p205 = scmp.ne.s32.totalorder %s190, %s204
    %p206 = scmp.eq.s32.totalorder %s21, 0
    %p207 = por %p205, %p206
    %s209 = sadd.s32 %s208, 1
    %p212 = scmp.eq.s32.totalorder %s15, 11
    %p213 = scmp.ne.s32.totalorder %s208, %s210
    %p214 = scmp.eq.s32.totalorder %s15, 0
    %p215 = por %p213, %p214
    %p216 = scmp.ne.s32.totalorder %s208, %s210
    %p217 = scmp.eq.s32.totalorder %s20, 11
    %p218 = por %p216, %p217
    %p219 = scmp.ne.s32.totalorder %s210, %s211
    %p220 = scmp.eq.s32.totalorder %s20, 0
    %p221 = por %p219, %p220
    %p222 = scmp.ne.s32.totalorder %s210, %s211
    %p223 = scmp.eq.s32.totalorder %s21, 11
    %p224 = por %p222, %p223
    %p226 = scmp.ne.s32.totalorder %s211, %s225
    %p227 = scmp.eq.s32.totalorder %s21, 0
    %p228 = por %p226, %p227
    %s229 = ssub.s32 %s23, %s30
    %p230 = scmp.eq.s32.totalorder %s229, 0
    %s232 = sadd.s32 %s231, 1
    %s233 = scalar_select %p230, %s231, %s232
    %p236 = pneg %p230
    %p237 = scmp.eq.s32.totalorder %s15, 11
    %p238 = por %p236, %p237
    %p239 = scmp.ne.s32.totalorder %s231, %s234
    %p240 = scmp.eq.s32.totalorder %s15, 0
    %p241 = por %p239, %p240
    %p242 = scmp.ne.s32.totalorder %s231, %s234
    %p243 = scmp.eq.s32.totalorder %s20, 11
    %p244 = por %p242, %p243
    %p245 = scmp.ne.s32.totalorder %s234, %s235
    %p246 = scmp.eq.s32.totalorder %s20, 0
    %p247 = por %p245, %p246
    %p248 = scmp.ne.s32.totalorder %s234, %s235
    %p249 = scmp.eq.s32.totalorder %s21, 11
    %p250 = por %p248, %p249
    %p252 = scmp.ne.s32.totalorder %s235, %s251
    %p253 = scmp.eq.s32.totalorder %s21, 0
    %p254 = por %p252, %p253
    %p255 = scmp.le.s32.totalorder 1, %s15
    %p256 = scmp.lt.s32.totalorder %s15, 13
    %p257 = pnand %p255, %p256
    %p258 = pneg %p257
    // Predicated region
    $region9: #{tpu_custom_call.1} parent=5 // pred_check
      _
    $region10: #{tpu_custom_call.1} parent=5 // pred_check_branch
      %260 = sbr.rel (%p257) target = $region12
    $region11: #{tpu_custom_call.1} parent=5 // pred_region
      %s261 = ssub.s32 %s15, 1
      // Predicated region
      $region13: #{tpu_custom_call.1} parent=11 // pred_check
        %p262 = pneg %p74
      $region14: #{tpu_custom_call.1} parent=11 // pred_check_branch
        %264 = sbr.rel (%p262) target = $region16
      $region15: #{tpu_custom_call.1} parent=11 // pred_region
        _
      $region16: #{tpu_custom_call.1} parent=11 // pred_fallthru
        _
      // Predicated region
      $region17: #{tpu_custom_call.1} parent=11 // pred_check
        %p265 = pneg %p95
      $region18: #{tpu_custom_call.1} parent=11 // pred_check_branch
        %267 = sbr.rel (%p265) target = $region20
      $region19: #{tpu_custom_call.1} parent=11 // pred_region
        _
      $region20: #{tpu_custom_call.1} parent=11 // pred_fallthru
        _
      // Predicated region
      $region21: #{tpu_custom_call.1} parent=11 // pred_check
        %p268 = pneg %p116
      $region22: #{tpu_custom_call.1} parent=11 // pred_check_branch
        %270 = sbr.rel (%p268) target = $region24
      $region23: #{tpu_custom_call.1} parent=11 // pred_region
        _
      $region24: #{tpu_custom_call.1} parent=11 // pred_fallthru
        _
      // Predicated region
      $region25: #{tpu_custom_call.1} parent=11 // pred_check
        %p271 = pneg %p137
      $region26: #{tpu_custom_call.1} parent=11 // pred_check_branch
        %273 = sbr.rel (%p271) target = $region28
      $region27: #{tpu_custom_call.1} parent=11 // pred_region
        _
      $region28: #{tpu_custom_call.1} parent=11 // pred_fallthru
        _
      // Predicated region
      $region29: #{tpu_custom_call.1} parent=11 // pred_check
        %p274 = pneg %p158
      $region30: #{tpu_custom_call.1} parent=11 // pred_check_branch
        %276 = sbr.rel (%p274) target = $region32
      $region31: #{tpu_custom_call.1} parent=11 // pred_region
        _
      $region32: #{tpu_custom_call.1} parent=11 // pred_fallthru
        _
      // Predicated region
      $region33: #{tpu_custom_call.1} parent=11 // pred_check
        %p277 = pneg %p179
      $region34: #{tpu_custom_call.1} parent=11 // pred_check_branch
        %279 = sbr.rel (%p277) target = $region36
      $region35: #{tpu_custom_call.1} parent=11 // pred_region
        _
      $region36: #{tpu_custom_call.1} parent=11 // pred_fallthru
        _
      // Predicated region
      $region37: #{tpu_custom_call.1} parent=11 // pred_check
        %p280 = pneg %p200
      $region38: #{tpu_custom_call.1} parent=11 // pred_check_branch
        %282 = sbr.rel (%p280) target = $region40
      $region39: #{tpu_custom_call.1} parent=11 // pred_region
        _
      $region40: #{tpu_custom_call.1} parent=11 // pred_fallthru
        _
      // Predicated region
      $region41: #{tpu_custom_call.1} parent=11 // pred_check
        %p283 = pneg %p221
      $region42: #{tpu_custom_call.1} parent=11 // pred_check_branch
        %285 = sbr.rel (%p283) target = $region44
      $region43: #{tpu_custom_call.1} parent=11 // pred_region
        _
      $region44: #{tpu_custom_call.1} parent=11 // pred_fallthru
        _
    $region12: #{tpu_custom_call.1} parent=5 // pred_fallthru
      _
    %p286 = scmp.lt.s32.totalorder %s15, 12
    // Predicated region
    $region45: #{tpu_custom_call.1} parent=5 // pred_check
      %p287 = pneg %p286
    $region46: #{tpu_custom_call.1} parent=5 // pred_check_branch
      %289 = sbr.rel (%p287) target = $region48
    $region47: #{tpu_custom_call.1} parent=5 // pred_region
      // Predicated region
      $region49: #{tpu_custom_call.1} parent=47 // pred_check
        %p290 = pneg %p47
      $region50: #{tpu_custom_call.1} parent=47 // pred_check_branch
        %292 = sbr.rel (%p290) target = $region52
      $region51: #{tpu_custom_call.1} parent=47 // pred_region
        %s293 = smul.u32 4, %s23
        %p294 = scmp.lt.s32.totalorder %s293, 15
        %s295 = scalar_select %p294, %s293, 15
        %s296 = smul.addr %s295, 8
        %s297 = scalar_lea.vmem %s0, %s296
        %s298 = smul.u32 4, %s23
      $region52: #{tpu_custom_call.1} parent=47 // pred_fallthru
        _
    $region48: #{tpu_custom_call.1} parent=5 // pred_fallthru
      _
    %p299 = scmp.le.s32.totalorder 1, %s15
    %p300 = scmp.lt.s32.totalorder %s15, 13
    %p301 = pnand %p299, %p300
    %p302 = pneg %p301
    // Predicated region
    $region53: #{tpu_custom_call.1} parent=5 // pred_check
      _
    $region54: #{tpu_custom_call.1} parent=5 // pred_check_branch
      %304 = sbr.rel (%p301) target = $region56
    $region55: #{tpu_custom_call.1} parent=5 // pred_region
      %s305 = ssub.s32 %s15, 1
      %s306 = smul.u32 4, %s25
      %p307 = scmp.lt.s32.totalorder %s306, 15
      %s308 = scalar_select %p307, %s306, 15
      %s309 = smul.addr %s308, 8
      %s310 = scalar_lea.vmem %s0, %s309
      %p311 = pneg %p53
      %p312 = pneg %p50
      %p313 = pneg %p74
      %p314 = pneg %p71
      %p315 = pneg %p95
      %p316 = pneg %p92
      %p317 = pneg %p116
      %p318 = pneg %p113
      %p319 = pneg %p137
      %p320 = pneg %p134
      %p321 = pneg %p158
      %p322 = pneg %p155
      %p323 = pneg %p179
      %p324 = pneg %p176
      %p325 = pneg %p200
      %p326 = pneg %p197
      %p327 = pneg %p221
      %p328 = pneg %p218
      %p329 = pneg %p247
      %p330 = pneg %p244
      %s331 = smul.u32 4, %s25
      %p332 = scmp.lt.s32.totalorder %s331, 15
      %s333 = scalar_select %p332, %s331, 15
      %s334 = smul.addr %s333, 8
      %s335 = scalar_lea.vmem %s9, %s334
      %s336 = smul.u32 4, %s25
      %p337 = scmp.lt.s32.totalorder %s336, 15
      %s338 = scalar_select %p337, %s336, 15
      %s339 = smul.addr %s338, 8
      %s340 = scalar_lea.vmem %s0, %s339
      %s341 = smul.u32 4, %s25
      %s342 = smul.u32 4, %s25
      %p343 = scmp.lt.s32.totalorder %s342, 15
      %s344 = scalar_select %p343, %s342, 15
      %s345 = smul.addr %s344, 8
      %s346 = scalar_lea.vmem %s9, %s345
      %s347 = smul.u32 4, %s25
      %p348 = scmp.eq.s32.totalorder %s24, 0
      %p349 = scmp.eq.s32.totalorder %s25, 0
      %p350 = pnand %p348, %p349
      %p351 = pneg %p350
      // Predicated region
      $region57: #{tpu_custom_call.1} parent=55 // pred_check
        _
      $region58: #{tpu_custom_call.1} parent=55 // pred_check_branch
        %353 = sbr.rel (%p350) target = $region60
      $region59: #{tpu_custom_call.1} parent=55 // pred_region
        %vm354 = vcmask 253952
        %355 = vst.msk [vmem:[#allocation2] sm:$0x1] %vm354, 1.0
        %356 = vst.msk [vmem:[#allocation4] sm:$0x1] %vm354, 0.0
        %357 = vst.msk [vmem:[#allocation3] sm:$0x1] %vm354, 1.0
        %358 = vst.msk [vmem:[#allocation5] sm:$0x1] %vm354, 0.0
      $region60: #{tpu_custom_call.1} parent=55 // pred_fallthru
        _
      %p359 = scmp.lt.s32.totalorder %s24, 2
      %p360 = pnand %p349, %p359
      %p361 = pneg %p360
      // Predicated region
      $region61: #{tpu_custom_call.1} parent=55 // pred_check
        _
      $region62: #{tpu_custom_call.1} parent=55 // pred_check_branch
        %363 = sbr.rel (%p360) target = $region64
      $region63: #{tpu_custom_call.1} parent=55 // pred_region
        %vm364 = vcmask 253952
        %365 = vst.msk [vmem:[#allocation6] sm:$0x1] %vm364, 0.0
        %366 = vst.msk [vmem:[#allocation7] sm:$0x1] %vm364, 0.0
      $region64: #{tpu_custom_call.1} parent=55 // pred_fallthru
        _
      %s367 = smul.u32 %s25, 32
      %v368 = vlaneseq
      %v369 = vshrl.u32 %v368, 7
      %v370 = vadd.s32 %v369, 8
      %v371 = vadd.s32 %v369, 16
      %v372 = vadd.s32 %v369, 24
      %v373 = vstv %s367
      %v374 = vadd.s32 %v373, %v369
      %v375 = vadd.s32 %v373, %v370
      %v376 = vadd.s32 %v373, %v371
      %v377 = vadd.s32 %v373, %v372
      %vm378 = vcmp.lt.s32.totalorder %v374, 100
      %vm379 = vcmp.lt.s32.totalorder %v375, 100
      %vm380 = vcmp.lt.s32.totalorder %v376, 100
      %vm381 = vcmp.lt.s32.totalorder %v377, 100
      %v382 = vsel %vm378, 1, 0
      %v383 = vsel %vm379, 1, 0
      %v384 = vsel %vm380, 1, 0
      %v385 = vsel %vm381, 1, 0
      %v386 = vcvt.s32.f32 %v382
      %v387 = vcvt.s32.f32 %v383
      %v388 = vcvt.s32.f32 %v384
      %v389 = vcvt.s32.f32 %v385
      %v390 = vld [vmem:[%s340] sm:$0xff]
      %v391 = vld [vmem:[%s340 + $0x8] sm:$0xff]
      %v392 = vld [vmem:[%s340 + $0x10] sm:$0xff]
      %v393 = vld [vmem:[%s340 + $0x18] sm:$0xff]
      %v394 = vld [vmem:[%s1] sm:$0xff]
      %v395 = vld [vmem:[%s1 + $0x8] sm:$0xff]
      %vm396 = vcmask 130048
      %v398 = vsel %vm396, %v390, 0
      %v401 = vsel %vm396, %v391, 0
      %v404 = vsel %vm396, %v392, 0
      %v407 = vsel %vm396, %v393, 0
      %409 = vmatprep.subr.mxu0 0.0
      %410 = vmatpush1.msra.mxu0 0.0
      %411 = vmatprep.subr.mxu0 0.0
      %412 = vmatpush1.msra.mxu0 0.0
      %413 = vmatprep.subr.mxu0 0.0
      %414 = vmatpush1.msra.mxu0 0.0
      %415 = vmatprep.subr.mxu0 0.0
      %416 = vmatpush1.msra.mxu0 0.0
      %417 = vmatprep.subr.mxu0 0.0
      %418 = vmatpush1.msra.mxu0 0.0
      %419 = vmatprep.subr.mxu0 0.0
      %420 = vmatpush1.msra.mxu0 0.0
      %421 = vmatprep.subr.mxu0 0.0
      %422 = vmatpush1.msra.mxu0 0.0
      %423 = vmatprep.subr.mxu0 0.0
      %424 = vmatpush1.msra.mxu0 0.0
      %425 = vmatprep.subr.mxu0 0.0
      %426 = vmatpush1.msra.mxu0 0.0
      %427 = vmatprep.subr.mxu0 0.0
      %428 = vmatpush1.msra.mxu0 0.0
      %429 = vmatprep.subr.mxu0 0.0
      %430 = vmatpush1.msra.mxu0 0.0
      %431 = vmatprep.subr.mxu0 0.0
      %432 = vmatpush1.msra.mxu0 0.0
      %433 = vmatprep.subr.mxu0 0.0
      %434 = vmatpush1.msra.mxu0 0.0
      %435 = vmatprep.subr.mxu0 0.0
      %436 = vmatpush1.msra.mxu0 0.0
      %437 = vmatprep.subr.mxu0 0.0
      %438 = vmatpush1.msra.mxu0 %v395
      %439 = vmatprep.subr.mxu0 0.0
      %440 = vmatpush1.msra.mxu0 %v394
      %441 = vmatprep.subr.mxu0 0.0
      %442 = vmatpush2.msra.mxu0 0.0
      %443 = vmatprep.subr.mxu0 0.0
      %444 = vmatpush2.msra.mxu0 0.0
      %445 = vmatprep.subr.mxu0 0.0
      %446 = vmatpush2.msra.mxu0 0.0
      %447 = vmatprep.subr.mxu0 0.0
      %448 = vmatpush2.msra.mxu0 0.0
      %449 = vmatprep.subr.mxu0 0.0
      %450 = vmatpush2.msra.mxu0 0.0
      %451 = vmatprep.subr.mxu0 0.0
      %452 = vmatpush2.msra.mxu0 0.0
      %453 = vmatprep.subr.mxu0 0.0
      %454 = vmatpush2.msra.mxu0 0.0
      %455 = vmatprep.subr.mxu0 0.0
      %456 = vmatpush2.msra.mxu0 0.0
      %457 = vmatprep.subr.mxu0 0.0
      %458 = vmatpush2.msra.mxu0 0.0
      %459 = vmatprep.subr.mxu0 0.0
      %460 = vmatpush2.msra.mxu0 0.0
      %461 = vmatprep.subr.mxu0 0.0
      %462 = vmatpush2.msra.mxu0 0.0
      %463 = vmatprep.subr.mxu0 0.0
      %464 = vmatpush2.msra.mxu0 0.0
      %465 = vmatprep.subr.mxu0 0.0
      %466 = vmatpush2.msra.mxu0 0.0
      %467 = vmatprep.subr.mxu0 0.0
      %468 = vmatpush2.msra.mxu0 0.0
      %469 = vmatprep.subr.mxu0 0.0
      %470 = vmatpush2.msra.mxu0 0.0
      %471 = vmatprep.subr.mxu0 0.0
      %472 = vmatpush2.msra.mxu0 0.0
      %473 = vmatprep.mubr.f32.mxu0 0.0
      %474 = vmatmul.mubr.f32.gmra.mxu0 %v398
      %v475 = vpop.f32.mrf.mxu0
      %v476 = vadd.f32 0.0, %v475
      %v477 = vpop.f32.mrf.mxu0
      %478 = vmatprep.mubr.f32.mxu0 0.0
      %479 = vmatmul.mubr.f32.gmra.mxu0 %v401
      %v480 = vpop.f32.mrf.mxu0
      %v481 = vadd.f32 0.0, %v480
      %v482 = vpop.f32.mrf.mxu0
      %483 = vmatprep.mubr.f32.mxu0 0.0
      %484 = vmatmul.mubr.f32.gmra.mxu0 %v404
      %v485 = vpop.f32.mrf.mxu0
      %v486 = vadd.f32 0.0, %v485
      %v487 = vpop.f32.mrf.mxu0
      %488 = vmatprep.mubr.f32.mxu0 0.0
      %489 = vmatmul.mubr.f32.gmra.mxu0 %v407
      %v490 = vpop.f32.mrf.mxu0
      %v491 = vadd.f32 0.0, %v490
      %v492 = vpop.f32.mrf.mxu0
      %493 = vdwg.mxu0
      // Predicated region
      $region65: #{tpu_custom_call.1} parent=55 // pred_check
        %p494 = pneg %p348
      $region66: #{tpu_custom_call.1} parent=55 // pred_check_branch
        %496 = sbr.rel (%p494) target = $region68
      $region67: #{tpu_custom_call.1} parent=55 // pred_region
        %v497 = vld [vmem:[#allocation6] sm:$0x1]
        %vm498 = vcmask 261120
        %v499 = vsel %vm498, %v476, 0.0
        %v500 = vsel %vm498, %v481, 0.0
        %v501 = vadd.f32 %v499, %v500
        %v502 = vsel %vm498, %v486, 0.0
        %v503 = vadd.f32 %v501, %v502
        %v504 = vsel %vm498, %v491, 0.0
        %v505 = vadd.f32 %v503, %v504
        %v506 = vrot.slane %v505, 4
        %v507 = vadd.f32 %v505, %v506
        %v508 = vrot.slane %v507, 2
        %v509 = vadd.f32 %v507, %v508
        %v510 = vrot.slane %v509, 1
        %v511 = vadd.f32 %v509, %v510
        %v512 = vadd.f32 %v497, %v511
        %vm513 = vcmask 253952
        %514 = vst.msk [vmem:[#allocation6] sm:$0x1] %vm513, %v512
        %v515 = vld [vmem:[#allocation7] sm:$0x1]
        %v516 = vmul.f32 %v476, %v476
        %v517 = vmul.f32 %v481, %v481
        %v518 = vmul.f32 %v486, %v486
        %v519 = vmul.f32 %v491, %v491
        %v520 = vsel %vm498, %v516, 0.0
        %v521 = vsel %vm498, %v517, 0.0
        %v522 = vadd.f32 %v520, %v521
        %v523 = vsel %vm498, %v518, 0.0
        %v524 = vadd.f32 %v522, %v523
        %v525 = vsel %vm498, %v519, 0.0
        %v526 = vadd.f32 %v524, %v525
        %v527 = vrot.slane %v526, 4
        %v528 = vadd.f32 %v526, %v527
        %v529 = vrot.slane %v528, 2
        %v530 = vadd.f32 %v528, %v529
        %v531 = vrot.slane %v530, 1
        %v532 = vadd.f32 %v530, %v531
        %v533 = vadd.f32 %v515, %v532
        %534 = vst.msk [vmem:[#allocation7] sm:$0x1] %vm513, %v533
      $region68: #{tpu_custom_call.1} parent=55 // pred_fallthru
        _
      %p535 = scmp.eq.s32.totalorder %s25, 3
      %p536 = pnand %p348, %p535
      %p537 = pneg %p536
      // Predicated region
      $region69: #{tpu_custom_call.1} parent=55 // pred_check
        _
      $region70: #{tpu_custom_call.1} parent=55 // pred_check_branch
        %539 = sbr.rel (%p536) target = $region72
      $region71: #{tpu_custom_call.1} parent=55 // pred_region
        %v540 = vld [vmem:[#allocation6] sm:$0x1]
        %v541 = vmul.f32 %v540, 0.01
        %v542 = vld [vmem:[#allocation7] sm:$0x1]
        %v543 = vmul.f32 %v542, 0.01
        %v544 = vmul.f32 %v541, %v541
        %v545 = vsub.f32 %v543, %v544
        %v546 = vmax.f32 %v545, 0.0
        %v547 = vld [vmem:[%s2] sm:$0x1]
        %v548 = vadd.f32 %v546, 1e-05
        %v549 = vrsqrt.pop %v548
        %v550 = vmul.f32 %v547, %v549
        %vm551 = vcmask 253952
        %552 = vst.msk [vmem:[#allocation2] sm:$0x1] %vm551, %v550
        %v553 = vld [vmem:[%s3] sm:$0x1]
        %v554 = vmul.f32 %v541, %v550
        %v555 = vsub.f32 %v553, %v554
        %556 = vst.msk [vmem:[#allocation4] sm:$0x1] %vm551, %v555
      $region72: #{tpu_custom_call.1} parent=55 // pred_fallthru
        _
      %v557 = vld [vmem:[#allocation2] sm:$0x1]
      %v559 = vlaneseq
      %v560 = vshrl.u32 %v559, 7
      %v561 = vsub.s32 0, %v560
      %v562 = vrot.slane %v557, %v561
      %v564 = vmul.f32 %v476, %v562
      %v565 = vmul.f32 %v481, %v562
      %v566 = vmul.f32 %v486, %v562
      %v567 = vmul.f32 %v491, %v562
      %v568 = vld [vmem:[#allocation4] sm:$0x1]
      %v570 = vlaneseq
      %v571 = vshrl.u32 %v570, 7
      %v572 = vsub.s32 0, %v571
      %v573 = vrot.slane %v568, %v572
      %v575 = vadd.f32 %v564, %v573
      %v576 = vadd.f32 %v565, %v573
      %v577 = vadd.f32 %v566, %v573
      %v578 = vadd.f32 %v567, %v573
      %v579 = vmul.f32 %v575, 0.5
      %v580 = vmul.f32 %v576, 0.5
      %v581 = vmul.f32 %v577, 0.5
      %v582 = vmul.f32 %v578, 0.5
      %v583 = vmul.f32 %v575, 0.70710677
      %v584 = vmul.f32 %v576, 0.70710677
      %v585 = vmul.f32 %v577, 0.70710677
      %v586 = vmul.f32 %v578, 0.70710677
      %v587 = verf.f32.pop %v583
      %v588 = verf.f32.pop %v584
      %v589 = verf.f32.pop %v585
      %v590 = verf.f32.pop %v586
      %v591 = vadd.f32 %v587, 1.0
      %v592 = vadd.f32 %v588, 1.0
      %v593 = vadd.f32 %v589, 1.0
      %v594 = vadd.f32 %v590, 1.0
      %v595 = vmul.f32 %v579, %v591
      %v596 = vmul.f32 %v580, %v592
      %v597 = vmul.f32 %v581, %v593
      %v598 = vmul.f32 %v582, %v594
      %v599 = vmul.f32 %v595, %v386
      %v600 = vmul.f32 %v596, %v387
      %v601 = vmul.f32 %v597, %v388
      %v602 = vmul.f32 %v598, %v389
      %v603 = vld [vmem:[%s4] sm:$0xff]
      %v604 = vld [vmem:[%s4 + $0x8] sm:$0xff]
      %v605 = vld [vmem:[%s4 + $0x10] sm:$0xff]
      %v606 = vld [vmem:[%s4 + $0x18] sm:$0xff]
      %vm607 = vcmask 261120
      %v609 = vsel %vm607, %v599, 0
      %v612 = vsel %vm607, %v600, 0
      %v615 = vsel %vm607, %v601, 0
      %v618 = vsel %vm607, %v602, 0
      %620 = vmatprep.subr.mxu0 0.0
      %621 = vmatpush1.msra.mxu0 0.0
      %622 = vmatprep.subr.mxu0 0.0
      %623 = vmatpush1.msra.mxu0 0.0
      %624 = vmatprep.subr.mxu0 0.0
      %625 = vmatpush1.msra.mxu0 0.0
      %626 = vmatprep.subr.mxu0 0.0
      %627 = vmatpush1.msra.mxu0 0.0
      %628 = vmatprep.subr.mxu0 0.0
      %629 = vmatpush1.msra.mxu0 0.0
      %630 = vmatprep.subr.mxu0 0.0
      %631 = vmatpush1.msra.mxu0 0.0
      %632 = vmatprep.subr.mxu0 0.0
      %633 = vmatpush1.msra.mxu0 0.0
      %634 = vmatprep.subr.mxu0 0.0
      %635 = vmatpush1.msra.mxu0 0.0
      %636 = vmatprep.subr.mxu0 0.0
      %637 = vmatpush1.msra.mxu0 0.0
      %638 = vmatprep.subr.mxu0 0.0
      %639 = vmatpush1.msra.mxu0 0.0
      %640 = vmatprep.subr.mxu0 0.0
      %641 = vmatpush1.msra.mxu0 0.0
      %642 = vmatprep.subr.mxu0 0.0
      %643 = vmatpush1.msra.mxu0 0.0
      %644 = vmatprep.subr.mxu0 0.0
      %645 = vmatpush1.msra.mxu0 %v606
      %646 = vmatprep.subr.mxu0 0.0
      %647 = vmatpush1.msra.mxu0 %v605
      %648 = vmatprep.subr.mxu0 0.0
      %649 = vmatpush1.msra.mxu0 %v604
      %650 = vmatprep.subr.mxu0 0.0
      %651 = vmatpush1.msra.mxu0 %v603
      %652 = vmatprep.subr.mxu0 0.0
      %653 = vmatpush2.msra.mxu0 0.0
      %654 = vmatprep.subr.mxu0 0.0
      %655 = vmatpush2.msra.mxu0 0.0
      %656 = vmatprep.subr.mxu0 0.0
      %657 = vmatpush2.msra.mxu0 0.0
      %658 = vmatprep.subr.mxu0 0.0
      %659 = vmatpush2.msra.mxu0 0.0
      %660 = vmatprep.subr.mxu0 0.0
      %661 = vmatpush2.msra.mxu0 0.0
      %662 = vmatprep.subr.mxu0 0.0
      %663 = vmatpush2.msra.mxu0 0.0
      %664 = vmatprep.subr.mxu0 0.0
      %665 = vmatpush2.msra.mxu0 0.0
      %666 = vmatprep.subr.mxu0 0.0
      %667 = vmatpush2.msra.mxu0 0.0
      %668 = vmatprep.subr.mxu0 0.0
      %669 = vmatpush2.msra.mxu0 0.0
      %670 = vmatprep.subr.mxu0 0.0
      %671 = vmatpush2.msra.mxu0 0.0
      %672 = vmatprep.subr.mxu0 0.0
      %673 = vmatpush2.msra.mxu0 0.0
      %674 = vmatprep.subr.mxu0 0.0
      %675 = vmatpush2.msra.mxu0 0.0
      %676 = vmatprep.subr.mxu0 0.0
      %677 = vmatpush2.msra.mxu0 0.0
      %678 = vmatprep.subr.mxu0 0.0
      %679 = vmatpush2.msra.mxu0 0.0
      %680 = vmatprep.subr.mxu0 0.0
      %681 = vmatpush2.msra.mxu0 0.0
      %682 = vmatprep.subr.mxu0 0.0
      %683 = vmatpush2.msra.mxu0 0.0
      %684 = vmatprep.mubr.f32.mxu0 0.0
      %685 = vmatmul.mubr.f32.gmra.mxu0 %v609
      %v686 = vpop.f32.mrf.mxu0
      %v687 = vadd.f32 0.0, %v686
      %v688 = vpop.f32.mrf.mxu0
      %689 = vmatprep.mubr.f32.mxu0 0.0
      %690 = vmatmul.mubr.f32.gmra.mxu0 %v612
      %v691 = vpop.f32.mrf.mxu0
      %v692 = vadd.f32 0.0, %v691
      %v693 = vpop.f32.mrf.mxu0
      %694 = vmatprep.mubr.f32.mxu0 0.0
      %695 = vmatmul.mubr.f32.gmra.mxu0 %v615
      %v696 = vpop.f32.mrf.mxu0
      %v697 = vadd.f32 0.0, %v696
      %v698 = vpop.f32.mrf.mxu0
      %699 = vmatprep.mubr.f32.mxu0 0.0
      %700 = vmatmul.mubr.f32.gmra.mxu0 %v618
      %v701 = vpop.f32.mrf.mxu0
      %v702 = vadd.f32 0.0, %v701
      %v703 = vpop.f32.mrf.mxu0
      %704 = vdwg.mxu0
      %p705 = scmp.eq.s32.totalorder %s24, 1
      // Predicated region
      $region73: #{tpu_custom_call.1} parent=55 // pred_check
        %p706 = pneg %p705
      $region74: #{tpu_custom_call.1} parent=55 // pred_check_branch
        %708 = sbr.rel (%p706) target = $region76
      $region75: #{tpu_custom_call.1} parent=55 // pred_region
        %v709 = vld [vmem:[#allocation6] sm:$0x1]
        %v710 = vsel %vm607, %v687, 0.0
        %v711 = vsel %vm607, %v692, 0.0
        %v712 = vadd.f32 %v710, %v711
        %v713 = vsel %vm607, %v697, 0.0
        %v714 = vadd.f32 %v712, %v713
        %v715 = vsel %vm607, %v702, 0.0
        %v716 = vadd.f32 %v714, %v715
        %v717 = vrot.slane %v716, 4
        %v718 = vadd.f32 %v716, %v717
        %v719 = vrot.slane %v718, 2
        %v720 = vadd.f32 %v718, %v719
        %v721 = vrot.slane %v720, 1
        %v722 = vadd.f32 %v720, %v721
        %v723 = vadd.f32 %v709, %v722
        %vm724 = vcmask 253952
        %725 = vst.msk [vmem:[#allocation6] sm:$0x1] %vm724, %v723
        %v726 = vld [vmem:[#allocation7] sm:$0x1]
        %v727 = vmul.f32 %v687, %v687
        %v728 = vmul.f32 %v692, %v692
        %v729 = vmul.f32 %v697, %v697
        %v730 = vmul.f32 %v702, %v702
        %v731 = vsel %vm607, %v727, 0.0
        %v732 = vsel %vm607, %v728, 0.0
        %v733 = vadd.f32 %v731, %v732
        %v734 = vsel %vm607, %v729, 0.0
        %v735 = vadd.f32 %v733, %v734
        %v736 = vsel %vm607, %v730, 0.0
        %v737 = vadd.f32 %v735, %v736
        %v738 = vrot.slane %v737, 4
        %v739 = vadd.f32 %v737, %v738
        %v740 = vrot.slane %v739, 2
        %v741 = vadd.f32 %v739, %v740
        %v742 = vrot.slane %v741, 1
        %v743 = vadd.f32 %v741, %v742
        %v744 = vadd.f32 %v726, %v743
        %745 = vst.msk [vmem:[#allocation7] sm:$0x1] %vm724, %v744
      $region76: #{tpu_custom_call.1} parent=55 // pred_fallthru
        _
      %p746 = pnand %p705, %p535
      %p747 = pneg %p746
      // Predicated region
      $region77: #{tpu_custom_call.1} parent=55 // pred_check
        _
      $region78: #{tpu_custom_call.1} parent=55 // pred_check_branch
        %749 = sbr.rel (%p746) target = $region80
      $region79: #{tpu_custom_call.1} parent=55 // pred_region
        %v750 = vld [vmem:[#allocation6] sm:$0x1]
        %v751 = vmul.f32 %v750, 0.01
        %v752 = vld [vmem:[#allocation7] sm:$0x1]
        %v753 = vmul.f32 %v752, 0.01
        %v754 = vmul.f32 %v751, %v751
        %v755 = vsub.f32 %v753, %v754
        %v756 = vmax.f32 %v755, 0.0
        %v757 = vld [vmem:[%s5] sm:$0x1]
        %v758 = vadd.f32 %v756, 1e-05
        %v759 = vrsqrt.pop %v758
        %v760 = vmul.f32 %v757, %v759
        %vm761 = vcmask 253952
        %762 = vst.msk [vmem:[#allocation3] sm:$0x1] %vm761, %v760
        %v763 = vld [vmem:[%s6] sm:$0x1]
        %v764 = vmul.f32 %v751, %v760
        %v765 = vsub.f32 %v763, %v764
        %766 = vst.msk [vmem:[#allocation5] sm:$0x1] %vm761, %v765
      $region80: #{tpu_custom_call.1} parent=55 // pred_fallthru
        _
      %v767 = vld [vmem:[#allocation3] sm:$0x1]
      %v769 = vlaneseq
      %v770 = vshrl.u32 %v769, 7
      %v771 = vsub.s32 0, %v770
      %v772 = vrot.slane %v767, %v771
      %v774 = vmul.f32 %v687, %v772
      %v775 = vmul.f32 %v692, %v772
      %v776 = vmul.f32 %v697, %v772
      %v777 = vmul.f32 %v702, %v772
      %v778 = vld [vmem:[#allocation5] sm:$0x1]
      %v780 = vlaneseq
      %v781 = vshrl.u32 %v780, 7
      %v782 = vsub.s32 0, %v781
      %v783 = vrot.slane %v778, %v782
      %v785 = vadd.f32 %v774, %v783
      %v786 = vadd.f32 %v775, %v783
      %v787 = vadd.f32 %v776, %v783
      %v788 = vadd.f32 %v777, %v783
      %v789 = vmul.f32 %v785, 0.5
      %v790 = vmul.f32 %v786, 0.5
      %v791 = vmul.f32 %v787, 0.5
      %v792 = vmul.f32 %v788, 0.5
      %v793 = vmul.f32 %v785, 0.70710677
      %v794 = vmul.f32 %v786, 0.70710677
      %v795 = vmul.f32 %v787, 0.70710677
      %v796 = vmul.f32 %v788, 0.70710677
      %v797 = verf.f32.pop %v793
      %v798 = verf.f32.pop %v794
      %v799 = verf.f32.pop %v795
      %v800 = verf.f32.pop %v796
      %v801 = vadd.f32 %v797, 1.0
      %v802 = vadd.f32 %v798, 1.0
      %v803 = vadd.f32 %v799, 1.0
      %v804 = vadd.f32 %v800, 1.0
      %v805 = vmul.f32 %v789, %v801
      %v806 = vmul.f32 %v790, %v802
      %v807 = vmul.f32 %v791, %v803
      %v808 = vmul.f32 %v792, %v804
      %v809 = vmul.f32 %v805, %v386
      %v810 = vmul.f32 %v806, %v387
      %v811 = vmul.f32 %v807, %v388
      %v812 = vmul.f32 %v808, %v389
      // Predicated region
      $region81: #{tpu_custom_call.1} parent=55 // pred_check
        %p813 = pneg %p359
      $region82: #{tpu_custom_call.1} parent=55 // pred_check_branch
        %815 = sbr.rel (%p813) target = $region84
      $region83: #{tpu_custom_call.1} parent=55 // pred_region
        %vm816 = vcmask 64512
        %817 = vst.msk [vmem:[%s346] sm:$0xff] %vm816, 0.0
        %818 = vst.msk [vmem:[%s346 + $0x8] sm:$0xff] %vm816, 0.0
        %819 = vst.msk [vmem:[%s346 + $0x10] sm:$0xff] %vm816, 0.0
        %820 = vst.msk [vmem:[%s346 + $0x18] sm:$0xff] %vm816, 0.0
      $region84: #{tpu_custom_call.1} parent=55 // pred_fallthru
        _
      %p821 = scmp.eq.s32.totalorder %s24, 2
      // Predicated region
      $region85: #{tpu_custom_call.1} parent=55 // pred_check
        %p822 = pneg %p821
      $region86: #{tpu_custom_call.1} parent=55 // pred_check_branch
        %824 = sbr.rel (%p822) target = $region88
      $region87: #{tpu_custom_call.1} parent=55 // pred_region
        %v825 = vld [vmem:[%s7] sm:$0xff]
        %v826 = vld [vmem:[%s7 + $0x8] sm:$0xff]
        %v827 = vld [vmem:[%s7 + $0x10] sm:$0xff]
        %v828 = vld [vmem:[%s7 + $0x18] sm:$0xff]
        %v829 = vld [vmem:[%s8] sm:$0x1]
        %v831 = vlaneseq
        %v832 = vshrl.u32 %v831, 7
        %v833 = vsub.s32 0, %v832
        %v834 = vrot.slane %v829, %v833
        %v837 = vsel %vm607, %v809, 0
        %v840 = vsel %vm607, %v810, 0
        %v843 = vsel %vm607, %v811, 0
        %v846 = vsel %vm607, %v812, 0
        %848 = vmatprep.subr.mxu0 0.0
        %849 = vmatpush1.msra.mxu0 0.0
        %850 = vmatprep.subr.mxu0 0.0
        %851 = vmatpush1.msra.mxu0 0.0
        %852 = vmatprep.subr.mxu0 0.0
        %853 = vmatpush1.msra.mxu0 0.0
        %854 = vmatprep.subr.mxu0 0.0
        %855 = vmatpush1.msra.mxu0 0.0
        %856 = vmatprep.subr.mxu0 0.0
        %857 = vmatpush1.msra.mxu0 0.0
        %858 = vmatprep.subr.mxu0 0.0
        %859 = vmatpush1.msra.mxu0 0.0
        %860 = vmatprep.subr.mxu0 0.0
        %861 = vmatpush1.msra.mxu0 0.0
        %862 = vmatprep.subr.mxu0 0.0
        %863 = vmatpush1.msra.mxu0 0.0
        %864 = vmatprep.subr.mxu0 0.0
        %865 = vmatpush1.msra.mxu0 0.0
        %866 = vmatprep.subr.mxu0 0.0
        %867 = vmatpush1.msra.mxu0 0.0
        %868 = vmatprep.subr.mxu0 0.0
        %869 = vmatpush1.msra.mxu0 0.0
        %870 = vmatprep.subr.mxu0 0.0
        %871 = vmatpush1.msra.mxu0 0.0
        %872 = vmatprep.subr.mxu0 0.0
        %873 = vmatpush1.msra.mxu0 %v828
        %874 = vmatprep.subr.mxu0 0.0
        %875 = vmatpush1.msra.mxu0 %v827
        %876 = vmatprep.subr.mxu0 0.0
        %877 = vmatpush1.msra.mxu0 %v826
        %878 = vmatprep.subr.mxu0 0.0
        %879 = vmatpush1.msra.mxu0 %v825
        %880 = vmatprep.subr.mxu0 0.0
        %881 = vmatpush2.msra.mxu0 0.0
        %882 = vmatprep.subr.mxu0 0.0
        %883 = vmatpush2.msra.mxu0 0.0
        %884 = vmatprep.subr.mxu0 0.0
        %885 = vmatpush2.msra.mxu0 0.0
        %886 = vmatprep.subr.mxu0 0.0
        %887 = vmatpush2.msra.mxu0 0.0
        %888 = vmatprep.subr.mxu0 0.0
        %889 = vmatpush2.msra.mxu0 0.0
        %890 = vmatprep.subr.mxu0 0.0
        %891 = vmatpush2.msra.mxu0 0.0
        %892 = vmatprep.subr.mxu0 0.0
        %893 = vmatpush2.msra.mxu0 0.0
        %894 = vmatprep.subr.mxu0 0.0
        %895 = vmatpush2.msra.mxu0 0.0
        %896 = vmatprep.subr.mxu0 0.0
        %897 = vmatpush2.msra.mxu0 0.0
        %898 = vmatprep.subr.mxu0 0.0
        %899 = vmatpush2.msra.mxu0 0.0
        %900 = vmatprep.subr.mxu0 0.0
        %901 = vmatpush2.msra.mxu0 0.0
        %902 = vmatprep.subr.mxu0 0.0
        %903 = vmatpush2.msra.mxu0 0.0
        %904 = vmatprep.subr.mxu0 0.0
        %905 = vmatpush2.msra.mxu0 0.0
        %906 = vmatprep.subr.mxu0 0.0
        %907 = vmatpush2.msra.mxu0 0.0
        %908 = vmatprep.subr.mxu0 0.0
        %909 = vmatpush2.msra.mxu0 0.0
        %910 = vmatprep.subr.mxu0 0.0
        %911 = vmatpush2.msra.mxu0 0.0
        %912 = vmatprep.mubr.f32.mxu0 0.0
        %913 = vmatmul.mubr.f32.gmra.mxu0 %v837
        %v914 = vpop.f32.mrf.mxu0
        %v915 = vadd.f32 %v834, %v914
        %v916 = vpop.f32.mrf.mxu0
        %917 = vmatprep.mubr.f32.mxu0 0.0
        %918 = vmatmul.mubr.f32.gmra.mxu0 %v840
        %v919 = vpop.f32.mrf.mxu0
        %v920 = vadd.f32 %v834, %v919
        %v921 = vpop.f32.mrf.mxu0
        %922 = vmatprep.mubr.f32.mxu0 0.0
        %923 = vmatmul.mubr.f32.gmra.mxu0 %v843
        %v924 = vpop.f32.mrf.mxu0
        %v925 = vadd.f32 %v834, %v924
        %v926 = vpop.f32.mrf.mxu0
        %927 = vmatprep.mubr.f32.mxu0 0.0
        %928 = vmatmul.mubr.f32.gmra.mxu0 %v846
        %v929 = vpop.f32.mrf.mxu0
        %v930 = vadd.f32 %v834, %v929
        %v931 = vpop.f32.mrf.mxu0
        %932 = vdwg.mxu0
        %vm933 = vcmask 64512
        %934 = vst.msk [vmem:[%s346] sm:$0xff] %vm933, %v915
        %935 = vst.msk [vmem:[%s346 + $0x8] sm:$0xff] %vm933, %v920
        %936 = vst.msk [vmem:[%s346 + $0x10] sm:$0xff] %vm933, %v925
        %937 = vst.msk [vmem:[%s346 + $0x18] sm:$0xff] %vm933, %v930
      $region88: #{tpu_custom_call.1} parent=55 // pred_fallthru
        _
      %s938 = smul.u32 4, %s25
      %p939 = scmp.lt.s32.totalorder %s938, 15
      %s940 = scalar_select %p939, %s938, 15
      %s941 = smul.addr %s940, 8
      %s942 = scalar_lea.vmem %s9, %s941
      // Predicated region
      $region89: #{tpu_custom_call.1} parent=55 // pred_check
        %p943 = pneg %p244
      $region90: #{tpu_custom_call.1} parent=55 // pred_check_branch
        %945 = sbr.rel (%p943) target = $region92
      $region91: #{tpu_custom_call.1} parent=55 // pred_region
        %s946 = smul.u32 4, %s25
      $region92: #{tpu_custom_call.1} parent=55 // pred_fallthru
        _
    $region56: #{tpu_custom_call.1} parent=5 // pred_fallthru
      _
    %p947 = scmp.le.s32.totalorder 2, %s15
    // Predicated region
    $region93: #{tpu_custom_call.1} parent=5 // pred_check
      %p948 = pneg %p947
    $region94: #{tpu_custom_call.1} parent=5 // pred_check_branch
      %950 = sbr.rel (%p948) target = $region96
    $region95: #{tpu_custom_call.1} parent=5 // pred_region
      %s951 = ssub.s32 %s15, 2
      // Predicated region
      $region97: #{tpu_custom_call.1} parent=95 // pred_check
        %p952 = pneg %p250
      $region98: #{tpu_custom_call.1} parent=95 // pred_check_branch
        %954 = sbr.rel (%p952) target = $region100
      $region99: #{tpu_custom_call.1} parent=95 // pred_region
        %s955 = smul.u32 4, %s27
        %p956 = scmp.lt.s32.totalorder %s955, 15
        %s957 = scalar_select %p956, %s955, 15
        %s958 = smul.addr %s957, 8
        %s959 = scalar_lea.vmem %s9, %s958
      $region100: #{tpu_custom_call.1} parent=95 // pred_fallthru
        _
    $region96: #{tpu_custom_call.1} parent=5 // pred_fallthru
      _
  $region6: #{tpu_custom_call.1} parent=0 // loop_footer
    %s19 = sadd.s32 1, %s15
  $region7: #{tpu_custom_call.1} parent=0 // loop_footer_branch
    %14 = sbr.rel target = $region3
  $region8: #{tpu_custom_call.1} parent=0 // loop_exit
    _

</llo_original>
